<compile_context>
chip_gen: v6e
topology: v6e:2x2x1
jax: 0.10.0
libtpu: 0.0.40
codegen_flags: <defaults>
</compile_context>

<pallas_src>
import jax
import jax.numpy as jnp
from jax import lax
from jax.experimental import pallas as pl
from jax.experimental.pallas import tpu as pltpu


def _mlp_kernel(x_ref,
                w1_ref, b1_ref,
                w2_ref, b2_ref,
                w3_ref, b3_ref,
                w4_ref, b4_ref,
                o_ref):
    """Fused 4-layer MLP forward, transposed so the batch rides the 128-lane axis.

    Activations are (out_features, batch_tile): (64,bt) -> (32,bt) -> (16,bt) -> (1,bt),
    so every matmul, bias add, ReLU and the final store are lane-dense.
    """
    x = x_ref[...]                                                   # f32 (bt, in)

    # Layer 1: W1 (64, in) contracted with x (bt, in) along `in` -> (64, bt).
    h = lax.dot_general(w1_ref[...], x,
                        dimension_numbers=(((1,), (1,)), ((), ())),
                        preferred_element_type=jnp.float32)
    h = jnp.maximum(h + b1_ref[...], 0.0)                            # (64, bt)

    # Layer 2: (32, 64) @ (64, bt) -> (32, bt)
    h = jnp.dot(w2_ref[...], h, preferred_element_type=jnp.float32)
    h = jnp.maximum(h + b2_ref[...], 0.0)

    # Layer 3: (16, 32) @ (32, bt) -> (16, bt)
    h = jnp.dot(w3_ref[...], h, preferred_element_type=jnp.float32)
    h = jnp.maximum(h + b3_ref[...], 0.0)

    # Layer 4: (1, 16) @ (16, bt) -> (1, bt); bias is a scalar read from SMEM.
    out = jnp.dot(w4_ref[...], h, preferred_element_type=jnp.float32) + b4_ref[0]
    o_ref[...] = out.astype(o_ref.dtype)


def _pick_batch_tile(batch, max_tile=2048):
    """Largest lane-dense (multiple-of-128) tile that divides `batch` and yields
    >= 2 grid steps, preferring an even step count (v7x has 2 TensorCores).
    Falls back to a single full-batch tile when batch < 256 or not 128-aligned
    (full-dim BlockSpec exception keeps that legal)."""
    if batch % 128 != 0 or batch < 256:
        return batch
    cands = [t for t in range(128, min(max_tile, batch // 2) + 1, 128)
             if batch % t == 0]
    if not cands:
        return batch
    even = [t for t in cands if (batch // t) % 2 == 0]
    return max(even) if even else max(cands)


def student_score_predictor(x, params, *, batch_tile=None):
    """Run the fused MLP Pallas kernel.

    x:      (B, input_size) float32
    params: PyTorch-layout dict: w1..w4 as (out_features, in_features),
            b1..b4 as (out_features,).
    Returns (B, 1) float32.
    """
    B, in_sz = x.shape
    if batch_tile is None:
        batch_tile = _pick_batch_tile(B)
    assert B % batch_tile == 0, "batch must be divisible by batch_tile"
    assert batch_tile == B or batch_tile % 128 == 0, \
        "batch_tile must be a multiple of 128 (or == B)"

    # Transposed kernel consumes weights directly in PyTorch (out, in) layout.
    # Biases become (out, 1) columns broadcast over the lane axis; b4 is a
    # scalar living in SMEM.
    w1, w2, w3, w4 = params["w1"], params["w2"], params["w3"], params["w4"]
    b1 = params["b1"].reshape(-1, 1)
    b2 = params["b2"].reshape(-1, 1)
    b3 = params["b3"].reshape(-1, 1)
    b4 = params["b4"].reshape(1)

    n_tiles = B // batch_tile
    h1, h2, h3 = w1.shape[0], w2.shape[0], w3.shape[0]

    # Weights/biases are tiny: one full block each, replicated across the grid.
    def full(shape):
        return pl.BlockSpec(shape, lambda i: (0, 0))

    grid_spec = pltpu.PrefetchScalarGridSpec(
        num_scalar_prefetch=0,
        grid=(n_tiles,),
        in_specs=[
            pl.BlockSpec((batch_tile, in_sz), lambda i: (i, 0)),   # x tile (f32)
            full(w1.shape), full(b1.shape),
            full(w2.shape), full(b2.shape),
            full(w3.shape), full(b3.shape),
            full(w4.shape),
            pl.BlockSpec(memory_space=pltpu.MemorySpace.SMEM),     # b4 scalar
        ],
        # Lane-dense output: batch mapped to the 128-lane axis.
        out_specs=pl.BlockSpec((1, batch_tile), lambda i: (0, i)),
    )

    flops = 2 * B * (in_sz * h1 + h1 * h2 + h2 * h3 + h3 * 1)
    bytes_accessed = (x.size * 4 + B * 4
                      + 4 * (w1.size + w2.size + w3.size + w4.size)
                      + 4 * (b1.size + b2.size + b3.size + b4.size))

    out_row = pl.pallas_call(
        _mlp_kernel,
        out_shape=jax.ShapeDtypeStruct((1, B), jnp.float32),
        grid_spec=grid_spec,
        compiler_params=pltpu.CompilerParams(
            dimension_semantics=("parallel",)),
        cost_estimate=pl.CostEstimate(
            flops=flops, transcendentals=0, bytes_accessed=bytes_accessed),
    )(x, w1, b1, w2, b2, w3, b3, w4, b4)

    return out_row.reshape(B, 1)


def init_params(key, input_size, hidden_sizes=(64, 32, 16)):
    """Deterministic init mimicking nn.Linear's U(-1/sqrt(fan_in), 1/sqrt(fan_in)).
    Stored in PyTorch layout: weight (out, in), bias (out,)."""
    sizes = [input_size] + list(hidden_sizes) + [1]
    params = {}
    for idx in range(len(sizes) - 1):
        fan_in, fan_out = sizes[idx], sizes[idx + 1]
        key, kw, kb = jax.random.split(key, 3)
        bound = 1.0 / jnp.sqrt(jnp.float32(fan_in))
        params[f"w{idx + 1}"] = jax.random.uniform(
            kw, (fan_out, fan_in), jnp.float32, -bound, bound)
        params[f"b{idx + 1}"] = jax.random.uniform(
            kb, (fan_out,), jnp.float32, -bound, bound)
    return params


def reference_forward(x, params):
    """Pure-f32 reference with the original module semantics (dropout = identity)."""
    h = jnp.maximum(x @ params["w1"].T + params["b1"], 0.0)
    h = jnp.maximum(h @ params["w2"].T + params["b2"], 0.0)
    h = jnp.maximum(h @ params["w3"].T + params["b3"], 0.0)
    return h @ params["w4"].T + params["b4"]


if __name__ == "__main__":
    key = jax.random.PRNGKey(0)
    key, kx = jax.random.split(key)

    batch = 256            # _pick_batch_tile -> 128-row tiles, 2 grid steps
    input_size = 32
    hidden_sizes = (64, 32, 16)

    x = jax.random.normal(kx, (batch, input_size), jnp.float32)
    params = init_params(key, input_size, hidden_sizes)

    # TODO(synk): Dropout(p=0.2) only acts in training mode; inference forward is
    # identity, so no stochastic masking is emitted in the kernel.
    out = student_score_predictor(x, params)
    out = jax.block_until_ready(out)

    assert out.shape == (batch, 1), out.shape
    ref = reference_forward(x, params)
    assert jnp.allclose(out, ref, atol=3e-2, rtol=3e-2), (
        "mismatch vs f32 reference; max abs err = %g"
        % float(jnp.max(jnp.abs(out - ref))))

    print("KERNEL_OK")
</pallas_src>

<mosaic_0001>
module attributes {stable_mosaic.version = 11 : i64} {
  func.func @_mlp_kernel(%arg0: i32, %arg1: memref<128x32xf32, #tpu.memory_space<vmem>>, %arg2: memref<64x32xf32, #tpu.memory_space<vmem>>, %arg3: memref<64x1xf32, #tpu.memory_space<vmem>>, %arg4: memref<32x64xf32, #tpu.memory_space<vmem>>, %arg5: memref<32x1xf32, #tpu.memory_space<vmem>>, %arg6: memref<16x32xf32, #tpu.memory_space<vmem>>, %arg7: memref<16x1xf32, #tpu.memory_space<vmem>>, %arg8: memref<1x16xf32, #tpu.memory_space<vmem>>, %arg9: memref<1xf32, #tpu.memory_space<smem>>, %arg10: memref<1x128xf32, #tpu.memory_space<vmem>>) attributes {dimension_semantics = [#tpu.dimension_semantics<parallel>], iteration_bounds = array<i64: 2>, scalar_prefetch = 0 : i64, scratch_operands = 0 : i64, tpu.core_type = #tpu.core_type<tc>, window_params = [{transform_indices = @transform_0, window_bounds = array<i64: 128, 32>}, {pipeline_mode = #tpu.pipeline_mode<synchronous>, transform_indices = @transform_1, window_bounds = array<i64: 64, 32>}, {pipeline_mode = #tpu.pipeline_mode<synchronous>, transform_indices = @transform_2, window_bounds = array<i64: 64, 1>}, {pipeline_mode = #tpu.pipeline_mode<synchronous>, transform_indices = @transform_3, window_bounds = array<i64: 32, 64>}, {pipeline_mode = #tpu.pipeline_mode<synchronous>, transform_indices = @transform_4, window_bounds = array<i64: 32, 1>}, {pipeline_mode = #tpu.pipeline_mode<synchronous>, transform_indices = @transform_5, window_bounds = array<i64: 16, 32>}, {pipeline_mode = #tpu.pipeline_mode<synchronous>, transform_indices = @transform_6, window_bounds = array<i64: 16, 1>}, {pipeline_mode = #tpu.pipeline_mode<synchronous>, transform_indices = @transform_7, window_bounds = array<i64: 1, 16>}, {transform_indices = @transform_8, window_bounds = array<i64: 1>}, {transform_indices = @transform_9, window_bounds = array<i64: 1, 128>}]} {
    %c0 = arith.constant 0 : index
    %c0_0 = arith.constant 0 : index
    %0 = vector.load %arg1[%c0, %c0_0] : memref<128x32xf32, #tpu.memory_space<vmem>>, vector<128x32xf32>
    %c0_1 = arith.constant 0 : index
    %c0_2 = arith.constant 0 : index
    %1 = vector.load %arg2[%c0_1, %c0_2] : memref<64x32xf32, #tpu.memory_space<vmem>>, vector<64x32xf32>
    %cst = arith.constant dense<0.000000e+00> : vector<64x128xf32>
    %2 = tpu.matmul %1, %0, %cst {dimension_numbers = #tpu.dot_dimension_numbers<[1], [1], [0], [0], [0, 0, 1, 0], [], []>} : vector<64x32xf32>, vector<128x32xf32>, vector<64x128xf32> -> vector<64x128xf32>
    %c0_3 = arith.constant 0 : index
    %c0_4 = arith.constant 0 : index
    %3 = vector.load %arg3[%c0_3, %c0_4] : memref<64x1xf32, #tpu.memory_space<vmem>>, vector<64x1xf32>
    %4 = vector.broadcast %3 : vector<64x1xf32> to vector<64x128xf32>
    %5 = arith.addf %2, %4 : vector<64x128xf32>
    %cst_5 = arith.constant 0.000000e+00 : f32
    %6 = vector.broadcast %cst_5 : f32 to vector<64x128xf32>
    %7 = arith.maximumf %5, %6 : vector<64x128xf32>
    %c0_6 = arith.constant 0 : index
    %c0_7 = arith.constant 0 : index
    %8 = vector.load %arg4[%c0_6, %c0_7] : memref<32x64xf32, #tpu.memory_space<vmem>>, vector<32x64xf32>
    %cst_8 = arith.constant dense<0.000000e+00> : vector<32x128xf32>
    %9 = tpu.matmul %8, %7, %cst_8 {dimension_numbers = #tpu.dot_dimension_numbers<[1], [0], [0], [1], [0, 0, 1, 1], [], []>} : vector<32x64xf32>, vector<64x128xf32>, vector<32x128xf32> -> vector<32x128xf32>
    %c0_9 = arith.constant 0 : index
    %c0_10 = arith.constant 0 : index
    %10 = vector.load %arg5[%c0_9, %c0_10] : memref<32x1xf32, #tpu.memory_space<vmem>>, vector<32x1xf32>
    %11 = vector.broadcast %10 : vector<32x1xf32> to vector<32x128xf32>
    %12 = arith.addf %9, %11 : vector<32x128xf32>
    %cst_11 = arith.constant 0.000000e+00 : f32
    %13 = vector.broadcast %cst_11 : f32 to vector<32x128xf32>
    %14 = arith.maximumf %12, %13 : vector<32x128xf32>
    %c0_12 = arith.constant 0 : index
    %c0_13 = arith.constant 0 : index
    %15 = vector.load %arg6[%c0_12, %c0_13] : memref<16x32xf32, #tpu.memory_space<vmem>>, vector<16x32xf32>
    %cst_14 = arith.constant dense<0.000000e+00> : vector<16x128xf32>
    %16 = tpu.matmul %15, %14, %cst_14 {dimension_numbers = #tpu.dot_dimension_numbers<[1], [0], [0], [1], [0, 0, 1, 1], [], []>} : vector<16x32xf32>, vector<32x128xf32>, vector<16x128xf32> -> vector<16x128xf32>
    %c0_15 = arith.constant 0 : index
    %c0_16 = arith.constant 0 : index
    %17 = vector.load %arg7[%c0_15, %c0_16] : memref<16x1xf32, #tpu.memory_space<vmem>>, vector<16x1xf32>
    %18 = vector.broadcast %17 : vector<16x1xf32> to vector<16x128xf32>
    %19 = arith.addf %16, %18 : vector<16x128xf32>
    %cst_17 = arith.constant 0.000000e+00 : f32
    %20 = vector.broadcast %cst_17 : f32 to vector<16x128xf32>
    %21 = arith.maximumf %19, %20 : vector<16x128xf32>
    %c0_18 = arith.constant 0 : index
    %c0_19 = arith.constant 0 : index
    %22 = vector.load %arg8[%c0_18, %c0_19] : memref<1x16xf32, #tpu.memory_space<vmem>>, vector<1x16xf32>
    %cst_20 = arith.constant dense<0.000000e+00> : vector<1x128xf32>
    %23 = tpu.matmul %22, %21, %cst_20 {dimension_numbers = #tpu.dot_dimension_numbers<[1], [0], [0], [1], [0, 0, 1, 1], [], []>} : vector<1x16xf32>, vector<16x128xf32>, vector<1x128xf32> -> vector<1x128xf32>
    %c0_21 = arith.constant 0 : index
    %24 = memref.load %arg9[%c0_21] : memref<1xf32, #tpu.memory_space<smem>>
    %25 = vector.broadcast %24 : f32 to vector<1x128xf32>
    %26 = arith.addf %23, %25 : vector<1x128xf32>
    %c0_22 = arith.constant 0 : index
    %c0_23 = arith.constant 0 : index
    %27 = vector.load %arg10[%c0_22, %c0_23] : memref<1x128xf32, #tpu.memory_space<vmem>>, vector<1x128xf32>
    tpu.vector_store %arg10[%c0_22, %c0_23], %26 {strides = array<i32>} : memref<1x128xf32, #tpu.memory_space<vmem>>, vector<1x128xf32>,
    return
  }
  func.func @transform_0(%arg0: i32) -> (i32, i32) {
    %c0_i32 = arith.constant 0 : i32
    %c0_i32_0 = arith.constant 0 : i32
    return %arg0, %c0_i32 : i32, i32
  }
  func.func @transform_1(%arg0: i32) -> (i32, i32) {
    %c0_i32 = arith.constant 0 : i32
    %c0_i32_0 = arith.constant 0 : i32
    %c0_i32_1 = arith.constant 0 : i32
    return %c0_i32, %c0_i32_0 : i32, i32
  }
  func.func @transform_2(%arg0: i32) -> (i32, i32) {
    %c0_i32 = arith.constant 0 : i32
    %c0_i32_0 = arith.constant 0 : i32
    %c0_i32_1 = arith.constant 0 : i32
    return %c0_i32, %c0_i32_0 : i32, i32
  }
  func.func @transform_3(%arg0: i32) -> (i32, i32) {
    %c0_i32 = arith.constant 0 : i32
    %c0_i32_0 = arith.constant 0 : i32
    %c0_i32_1 = arith.constant 0 : i32
    return %c0_i32, %c0_i32_0 : i32, i32
  }
  func.func @transform_4(%arg0: i32) -> (i32, i32) {
    %c0_i32 = arith.constant 0 : i32
    %c0_i32_0 = arith.constant 0 : i32
    %c0_i32_1 = arith.constant 0 : i32
    return %c0_i32, %c0_i32_0 : i32, i32
  }
  func.func @transform_5(%arg0: i32) -> (i32, i32) {
    %c0_i32 = arith.constant 0 : i32
    %c0_i32_0 = arith.constant 0 : i32
    %c0_i32_1 = arith.constant 0 : i32
    return %c0_i32, %c0_i32_0 : i32, i32
  }
  func.func @transform_6(%arg0: i32) -> (i32, i32) {
    %c0_i32 = arith.constant 0 : i32
    %c0_i32_0 = arith.constant 0 : i32
    %c0_i32_1 = arith.constant 0 : i32
    return %c0_i32, %c0_i32_0 : i32, i32
  }
  func.func @transform_7(%arg0: i32) -> (i32, i32) {
    %c0_i32 = arith.constant 0 : i32
    %c0_i32_0 = arith.constant 0 : i32
    %c0_i32_1 = arith.constant 0 : i32
    return %c0_i32, %c0_i32_0 : i32, i32
  }
  func.func @transform_8(%arg0: i32) -> i32 {
    %c0_i32 = arith.constant 0 : i32
    %c0_i32_0 = arith.constant 0 : i32
    return %c0_i32 : i32
  }
  func.func @transform_9(%arg0: i32) -> (i32, i32) {
    %c0_i32 = arith.constant 0 : i32
    %c0_i32_0 = arith.constant 0 : i32
    return %c0_i32, %arg0 : i32, i32
  }
}

</mosaic_0001>

<llo_original>
// kernel: tpu_custom_call.1
$region0: #{tpu_custom_call.1}
  #allocation0 [shape = 'u32[]', space=smem, size = 0x4, offset = 0x4, fixed_abs, tag = 'smem constant byte address 0x4 - core index']
  #allocation1 [shape = 'u32[144,128]{1,0:T(1,128)}', space=vmem, size = 0x12000, scoped, tag = 'internal scratch']
  #allocation2 [shape = 'f32[1]{0:T(128)S(6)}', space=smem, size = 0x200, scoped, tag = 'scoped memory for tpu_custom_call.1']
  %s0 = inlined_call_operand.vmem [shape: f32[256,32], index: 0, kind: input, shape index: {}]
  %s1 = inlined_call_operand.vmem [shape: f32[64,32], index: 1, kind: input, shape index: {}]
  %s2 = inlined_call_operand.vmem [shape: f32[64,1], index: 2, kind: input, shape index: {}]
  %s3 = inlined_call_operand.vmem [shape: f32[32,64], index: 3, kind: input, shape index: {}]
  %s4 = inlined_call_operand.vmem [shape: f32[32,1], index: 4, kind: input, shape index: {}]
  %s5 = inlined_call_operand.vmem [shape: f32[16,32], index: 5, kind: input, shape index: {}]
  %s6 = inlined_call_operand.vmem [shape: f32[16,1], index: 6, kind: input, shape index: {}]
  %s7 = inlined_call_operand.vmem [shape: f32[1,16], index: 7, kind: input, shape index: {}]
  %s8 = inlined_call_operand.<no memory space> [shape: f32[1], index: 8, kind: input, shape index: {}]
  %s9 = inlined_call_operand.hbm [shape: f32[1,256], index: 9, kind: output, shape index: {}]
  %s10 = sld [smem:[#allocation0]]
  $region69: #{tpu_custom_call.1} parent=0
    _
  %s12 = ssub.s32 1, %s10
  %s13 = scalar_select 0, %s12, %s10
  %14 = sst [smem:[#allocation2]] %s8
  $region1: #{tpu_custom_call.1} parent=0
    #allocation3 [shape = 'u8[1024]{0}', space=vmem, size = 0x400, scoped, tag = 'output window, operand 0']
    #allocation4 [shape = 's32[2]{0}', space=sflag, size = 0x8, scoped, tag = 'scoped memory for tpu_custom_call.1']
    %15 = vsyncpa [#allocation4], 0
    %s16 = scalar_lea.sflag [#allocation4], 1
    %17 = vsyncpa %s16, 0
    loop: start=0, step=1, limit=4
    $region2: #{tpu_custom_call.1} parent=1 // loop_pre_header
      _
    $region3: #{tpu_custom_call.1} parent=1 // loop_header
      %s19 = sphi 0, %s23
      %p20 = scmp.ge.s32.totalorder %s19, 4
      %s29 = sphi 0, %s31
      %s32 = sphi 0, %s29
      %s33 = sphi 0, %s32
      %s49 = sphi 0, %s33
      %s53 = sphi 0, %s53
      %s55 = sphi 0, %s53
      %s56 = sphi 0, %s55
      %s70 = sphi 0, %s56
      %s74 = sphi 0, %s74
      %s76 = sphi 0, %s74
      %s77 = sphi 0, %s76
      %s91 = sphi 0, %s77
      %s95 = sphi 0, %s95
      %s97 = sphi 0, %s95
      %s98 = sphi 0, %s97
      %s112 = sphi 0, %s98
      %s116 = sphi 0, %s116
      %s118 = sphi 0, %s116
      %s119 = sphi 0, %s118
      %s133 = sphi 0, %s119
      %s137 = sphi 0, %s137
      %s139 = sphi 0, %s137
      %s140 = sphi 0, %s139
      %s154 = sphi 0, %s140
      %s158 = sphi 0, %s158
      %s160 = sphi 0, %s158
      %s161 = sphi 0, %s160
      %s175 = sphi 0, %s161
      %s179 = sphi 0, %s179
      %s181 = sphi 0, %s179
      %s182 = sphi 0, %s181
      %s196 = sphi 0, %s182
      %s200 = sphi 0, %s200
      %s202 = sphi 0, %s200
      %s203 = sphi 0, %s202
      %s217 = sphi 0, %s203
      %s223 = sphi 0, %s225
      %s226 = sphi 0, %s223
      %s227 = sphi 0, %s226
      %s243 = sphi 0, %s227
    $region4: #{tpu_custom_call.1} parent=1 // loop_header_branch
      %22 = sbr.rel (%p20) target = $region8
    $region5: #{tpu_custom_call.1} parent=1 // loop_body
      %s24 = ssub.s32 %s19, 1
      %s25 = ssub.s32 %s19, 2
      %s26 = sadd.s32 %s19, 1
      %s27 = ssub.s32 %s19, %s26
      %p28 = scmp.eq.s32.totalorder %s27, 0
      %s30 = sadd.s32 %s29, 1
      %s31 = scalar_select %p28, %s29, %s30
      %p34 = pneg %p28
      %p35 = scmp.eq.s32.totalorder %s19, 1
      %p36 = por %p34, %p35
      %p37 = scmp.ne.s32.totalorder %s29, %s32
      %p38 = scmp.eq.s32.totalorder %s19, 0
      %p39 = por %p37, %p38
      %p40 = scmp.ne.s32.totalorder %s29, %s32
      %p41 = scmp.eq.s32.totalorder %s24, 1
      %p42 = por %p40, %p41
      %p43 = scmp.ne.s32.totalorder %s32, %s33
      %p44 = scmp.eq.s32.totalorder %s24, 0
      %p45 = por %p43, %p44
      %p46 = scmp.ne.s32.totalorder %s32, %s33
      %p47 = scmp.eq.s32.totalorder %s25, 1
      %p48 = por %p46, %p47
      %p50 = scmp.ne.s32.totalorder %s33, %s49
      %p51 = scmp.eq.s32.totalorder %s25, 0
      %p52 = por %p50, %p51
      %s54 = sadd.s32 %s53, 1
      %p57 = scmp.eq.s32.totalorder %s19, 1
      %p58 = scmp.ne.s32.totalorder %s53, %s55
      %p59 = scmp.eq.s32.totalorder %s19, 0
      %p60 = por %p58, %p59
      %p61 = scmp.ne.s32.totalorder %s53, %s55
      %p62 = scmp.eq.s32.totalorder %s24, 1
      %p63 = por %p61, %p62
      %p64 = scmp.ne.s32.totalorder %s55, %s56
      %p65 = scmp.eq.s32.totalorder %s24, 0
      %p66 = por %p64, %p65
      %p67 = scmp.ne.s32.totalorder %s55, %s56
      %p68 = scmp.eq.s32.totalorder %s25, 1
      %p69 = por %p67, %p68
      %p71 = scmp.ne.s32.totalorder %s56, %s70
      %p72 = scmp.eq.s32.totalorder %s25, 0
      %p73 = por %p71, %p72
      %s75 = sadd.s32 %s74, 1
      %p78 = scmp.eq.s32.totalorder %s19, 1
      %p79 = scmp.ne.s32.totalorder %s74, %s76
      %p80 = scmp.eq.s32.totalorder %s19, 0
      %p81 = por %p79, %p80
      %p82 = scmp.ne.s32.totalorder %s74, %s76
      %p83 = scmp.eq.s32.totalorder %s24, 1
      %p84 = por %p82, %p83
      %p85 = scmp.ne.s32.totalorder %s76, %s77
      %p86 = scmp.eq.s32.totalorder %s24, 0
      %p87 = por %p85, %p86
      %p88 = scmp.ne.s32.totalorder %s76, %s77
      %p89 = scmp.eq.s32.totalorder %s25, 1
      %p90 = por %p88, %p89
      %p92 = scmp.ne.s32.totalorder %s77, %s91
      %p93 = scmp.eq.s32.totalorder %s25, 0
      %p94 = por %p92, %p93
      %s96 = sadd.s32 %s95, 1
      %p99 = scmp.eq.s32.totalorder %s19, 1
      %p100 = scmp.ne.s32.totalorder %s95, %s97
      %p101 = scmp.eq.s32.totalorder %s19, 0
      %p102 = por %p100, %p101
      %p103 = scmp.ne.s32.totalorder %s95, %s97
      %p104 = scmp.eq.s32.totalorder %s24, 1
      %p105 = por %p103, %p104
      %p106 = scmp.ne.s32.totalorder %s97, %s98
      %p107 = scmp.eq.s32.totalorder %s24, 0
      %p108 = por %p106, %p107
      %p109 = scmp.ne.s32.totalorder %s97, %s98
      %p110 = scmp.eq.s32.totalorder %s25, 1
      %p111 = por %p109, %p110
      %p113 = scmp.ne.s32.totalorder %s98, %s112
      %p114 = scmp.eq.s32.totalorder %s25, 0
      %p115 = por %p113, %p114
      %s117 = sadd.s32 %s116, 1
      %p120 = scmp.eq.s32.totalorder %s19, 1
      %p121 = scmp.ne.s32.totalorder %s116, %s118
      %p122 = scmp.eq.s32.totalorder %s19, 0
      %p123 = por %p121, %p122
      %p124 = scmp.ne.s32.totalorder %s116, %s118
      %p125 = scmp.eq.s32.totalorder %s24, 1
      %p126 = por %p124, %p125
      %p127 = scmp.ne.s32.totalorder %s118, %s119
      %p128 = scmp.eq.s32.totalorder %s24, 0
      %p129 = por %p127, %p128
      %p130 = scmp.ne.s32.totalorder %s118, %s119
      %p131 = scmp.eq.s32.totalorder %s25, 1
      %p132 = por %p130, %p131
      %p134 = scmp.ne.s32.totalorder %s119, %s133
      %p135 = scmp.eq.s32.totalorder %s25, 0
      %p136 = por %p134, %p135
      %s138 = sadd.s32 %s137, 1
      %p141 = scmp.eq.s32.totalorder %s19, 1
      %p142 = scmp.ne.s32.totalorder %s137, %s139
      %p143 = scmp.eq.s32.totalorder %s19, 0
      %p144 = por %p142, %p143
      %p145 = scmp.ne.s32.totalorder %s137, %s139
      %p146 = scmp.eq.s32.totalorder %s24, 1
      %p147 = por %p145, %p146
      %p148 = scmp.ne.s32.totalorder %s139, %s140
      %p149 = scmp.eq.s32.totalorder %s24, 0
      %p150 = por %p148, %p149
      %p151 = scmp.ne.s32.totalorder %s139, %s140
      %p152 = scmp.eq.s32.totalorder %s25, 1
      %p153 = por %p151, %p152
      %p155 = scmp.ne.s32.totalorder %s140, %s154
      %p156 = scmp.eq.s32.totalorder %s25, 0
      %p157 = por %p155, %p156
      %s159 = sadd.s32 %s158, 1
      %p162 = scmp.eq.s32.totalorder %s19, 1
      %p163 = scmp.ne.s32.totalorder %s158, %s160
      %p164 = scmp.eq.s32.totalorder %s19, 0
      %p165 = por %p163, %p164
      %p166 = scmp.ne.s32.totalorder %s158, %s160
      %p167 = scmp.eq.s32.totalorder %s24, 1
      %p168 = por %p166, %p167
      %p169 = scmp.ne.s32.totalorder %s160, %s161
      %p170 = scmp.eq.s32.totalorder %s24, 0
      %p171 = por %p169, %p170
      %p172 = scmp.ne.s32.totalorder %s160, %s161
      %p173 = scmp.eq.s32.totalorder %s25, 1
      %p174 = por %p172, %p173
      %p176 = scmp.ne.s32.totalorder %s161, %s175
      %p177 = scmp.eq.s32.totalorder %s25, 0
      %p178 = por %p176, %p177
      %s180 = sadd.s32 %s179, 1
      %p183 = scmp.eq.s32.totalorder %s19, 1
      %p184 = scmp.ne.s32.totalorder %s179, %s181
      %p185 = scmp.eq.s32.totalorder %s19, 0
      %p186 = por %p184, %p185
      %p187 = scmp.ne.s32.totalorder %s179, %s181
      %p188 = scmp.eq.s32.totalorder %s24, 1
      %p189 = por %p187, %p188
      %p190 = scmp.ne.s32.totalorder %s181, %s182
      %p191 = scmp.eq.s32.totalorder %s24, 0
      %p192 = por %p190, %p191
      %p193 = scmp.ne.s32.totalorder %s181, %s182
      %p194 = scmp.eq.s32.totalorder %s25, 1
      %p195 = por %p193, %p194
      %p197 = scmp.ne.s32.totalorder %s182, %s196
      %p198 = scmp.eq.s32.totalorder %s25, 0
      %p199 = por %p197, %p198
      %s201 = sadd.s32 %s200, 1
      %p204 = scmp.eq.s32.totalorder %s19, 1
      %p205 = scmp.ne.s32.totalorder %s200, %s202
      %p206 = scmp.eq.s32.totalorder %s19, 0
      %p207 = por %p205, %p206
      %p208 = scmp.ne.s32.totalorder %s200, %s202
      %p209 = scmp.eq.s32.totalorder %s24, 1
      %p210 = por %p208, %p209
      %p211 = scmp.ne.s32.totalorder %s202, %s203
      %p212 = scmp.eq.s32.totalorder %s24, 0
      %p213 = por %p211, %p212
      %p214 = scmp.ne.s32.totalorder %s202, %s203
      %p215 = scmp.eq.s32.totalorder %s25, 1
      %p216 = por %p214, %p215
      %p218 = scmp.ne.s32.totalorder %s203, %s217
      %p219 = scmp.eq.s32.totalorder %s25, 0
      %p220 = por %p218, %p219
      %s221 = ssub.s32 %s19, %s26
      %p222 = scmp.eq.s32.totalorder %s221, 0
      %s224 = sadd.s32 %s223, 1
      %s225 = scalar_select %p222, %s223, %s224
      %p228 = pneg %p222
      %p229 = scmp.eq.s32.totalorder %s19, 1
      %p230 = por %p228, %p229
      %p231 = scmp.ne.s32.totalorder %s223, %s226
      %p232 = scmp.eq.s32.totalorder %s19, 0
      %p233 = por %p231, %p232
      %p234 = scmp.ne.s32.totalorder %s223, %s226
      %p235 = scmp.eq.s32.totalorder %s24, 1
      %p236 = por %p234, %p235
      %p237 = scmp.ne.s32.totalorder %s226, %s227
      %p238 = scmp.eq.s32.totalorder %s24, 0
      %p239 = por %p237, %p238
      %p240 = scmp.ne.s32.totalorder %s226, %s227
      %p241 = scmp.eq.s32.totalorder %s25, 1
      %p242 = por %p240, %p241
      %p244 = scmp.ne.s32.totalorder %s227, %s243
      %p245 = scmp.eq.s32.totalorder %s25, 0
      %p246 = por %p244, %p245
      %p247 = scmp.le.s32.totalorder 1, %s19
      %p248 = scmp.lt.s32.totalorder %s19, 3
      %p249 = pnand %p247, %p248
      %p250 = pneg %p249
      // Predicated region
      $region9: #{tpu_custom_call.1} parent=5 // pred_check
        _
      $region10: #{tpu_custom_call.1} parent=5 // pred_check_branch
        %252 = sbr.rel (%p249) target = $region12
      $region11: #{tpu_custom_call.1} parent=5 // pred_region
        %s253 = ssub.s32 %s19, 1
        // Predicated region
        $region13: #{tpu_custom_call.1} parent=11 // pred_check
          %p254 = pneg %p66
        $region14: #{tpu_custom_call.1} parent=11 // pred_check_branch
          %256 = sbr.rel (%p254) target = $region16
        $region15: #{tpu_custom_call.1} parent=11 // pred_region
          _
        $region16: #{tpu_custom_call.1} parent=11 // pred_fallthru
          _
        // Predicated region
        $region17: #{tpu_custom_call.1} parent=11 // pred_check
          %p257 = pneg %p87
        $region18: #{tpu_custom_call.1} parent=11 // pred_check_branch
          %259 = sbr.rel (%p257) target = $region20
        $region19: #{tpu_custom_call.1} parent=11 // pred_region
          _
        $region20: #{tpu_custom_call.1} parent=11 // pred_fallthru
          _
        // Predicated region
        $region21: #{tpu_custom_call.1} parent=11 // pred_check
          %p260 = pneg %p108
        $region22: #{tpu_custom_call.1} parent=11 // pred_check_branch
          %262 = sbr.rel (%p260) target = $region24
        $region23: #{tpu_custom_call.1} parent=11 // pred_region
          _
        $region24: #{tpu_custom_call.1} parent=11 // pred_fallthru
          _
        // Predicated region
        $region25: #{tpu_custom_call.1} parent=11 // pred_check
          %p263 = pneg %p129
        $region26: #{tpu_custom_call.1} parent=11 // pred_check_branch
          %265 = sbr.rel (%p263) target = $region28
        $region27: #{tpu_custom_call.1} parent=11 // pred_region
          _
        $region28: #{tpu_custom_call.1} parent=11 // pred_fallthru
          _
        // Predicated region
        $region29: #{tpu_custom_call.1} parent=11 // pred_check
          %p266 = pneg %p150
        $region30: #{tpu_custom_call.1} parent=11 // pred_check_branch
          %268 = sbr.rel (%p266) target = $region32
        $region31: #{tpu_custom_call.1} parent=11 // pred_region
          _
        $region32: #{tpu_custom_call.1} parent=11 // pred_fallthru
          _
        // Predicated region
        $region33: #{tpu_custom_call.1} parent=11 // pred_check
          %p269 = pneg %p171
        $region34: #{tpu_custom_call.1} parent=11 // pred_check_branch
          %271 = sbr.rel (%p269) target = $region36
        $region35: #{tpu_custom_call.1} parent=11 // pred_region
          _
        $region36: #{tpu_custom_call.1} parent=11 // pred_fallthru
          _
        // Predicated region
        $region37: #{tpu_custom_call.1} parent=11 // pred_check
          %p272 = pneg %p192
        $region38: #{tpu_custom_call.1} parent=11 // pred_check_branch
          %274 = sbr.rel (%p272) target = $region40
        $region39: #{tpu_custom_call.1} parent=11 // pred_region
          _
        $region40: #{tpu_custom_call.1} parent=11 // pred_fallthru
          _
        // Predicated region
        $region41: #{tpu_custom_call.1} parent=11 // pred_check
          %p275 = pneg %p213
        $region42: #{tpu_custom_call.1} parent=11 // pred_check_branch
          %277 = sbr.rel (%p275) target = $region44
        $region43: #{tpu_custom_call.1} parent=11 // pred_region
          _
        $region44: #{tpu_custom_call.1} parent=11 // pred_fallthru
          _
      $region12: #{tpu_custom_call.1} parent=5 // pred_fallthru
        _
      %p278 = scmp.lt.s32.totalorder %s19, 2
      // Predicated region
      $region45: #{tpu_custom_call.1} parent=5 // pred_check
        %p279 = pneg %p278
      $region46: #{tpu_custom_call.1} parent=5 // pred_check_branch
        %281 = sbr.rel (%p279) target = $region48
      $region47: #{tpu_custom_call.1} parent=5 // pred_region
        // Predicated region
        $region49: #{tpu_custom_call.1} parent=47 // pred_check
          %p282 = pneg %p39
        $region50: #{tpu_custom_call.1} parent=47 // pred_check_branch
          %284 = sbr.rel (%p282) target = $region52
        $region51: #{tpu_custom_call.1} parent=47 // pred_region
          %s285 = smul.u32 16, %s19
          %p286 = scmp.lt.s32.totalorder %s285, 31
          %s287 = scalar_select %p286, %s285, 31
          %s288 = smul.addr %s287, 8
          %s289 = scalar_lea.vmem %s0, %s288
          %s290 = smul.u32 16, %s19
        $region52: #{tpu_custom_call.1} parent=47 // pred_fallthru
          _
      $region48: #{tpu_custom_call.1} parent=5 // pred_fallthru
        _
      %p291 = scmp.le.s32.totalorder 1, %s19
      %p292 = scmp.lt.s32.totalorder %s19, 3
      %p293 = pnand %p291, %p292
      %p294 = pneg %p293
      // Predicated region
      $region53: #{tpu_custom_call.1} parent=5 // pred_check
        _
      $region54: #{tpu_custom_call.1} parent=5 // pred_check_branch
        %296 = sbr.rel (%p293) target = $region56
      $region55: #{tpu_custom_call.1} parent=5 // pred_region
        %s297 = ssub.s32 %s19, 1
        %s298 = smul.u32 16, %s24
        %p299 = scmp.lt.s32.totalorder %s298, 31
        %s300 = scalar_select %p299, %s298, 31
        %s301 = smul.addr %s300, 8
        %s302 = scalar_lea.vmem %s0, %s301
        %p303 = pneg %p45
        %p304 = pneg %p42
        %p305 = pneg %p66
        %p306 = pneg %p63
        %p307 = pneg %p87
        %p308 = pneg %p84
        %p309 = pneg %p108
        %p310 = pneg %p105
        %p311 = pneg %p129
        %p312 = pneg %p126
        %p313 = pneg %p150
        %p314 = pneg %p147
        %p315 = pneg %p171
        %p316 = pneg %p168
        %p317 = pneg %p192
        %p318 = pneg %p189
        %p319 = pneg %p213
        %p320 = pneg %p210
        %p321 = pneg %p239
        %p322 = pneg %p236
        %s323 = sand.u32 %s226, 1
        %s324 = scalar_lea.sflag [#allocation4], %s323
        %s325 = sand.u32 %s226, 1
        %s326 = scalar_lea.vmem [#allocation3], %s325
        %s327 = smul.u32 16, %s24
        %p328 = scmp.lt.s32.totalorder %s327, 31
        %s329 = scalar_select %p328, %s327, 31
        %s330 = smul.addr %s329, 8
        %s331 = scalar_lea.vmem %s0, %s330
        %s332 = smul.u32 16, %s24
        %v333 = vld [vmem:[%s331] sm:$0xff]
        %v334 = vld [vmem:[%s331 + $0x8] sm:$0xff]
        %v335 = vld [vmem:[%s331 + $0x10] sm:$0xff]
        %v336 = vld [vmem:[%s331 + $0x18] sm:$0xff]
        %v337 = vld [vmem:[%s331 + $0x20] sm:$0xff]
        %v338 = vld [vmem:[%s331 + $0x28] sm:$0xff]
        %v339 = vld [vmem:[%s331 + $0x30] sm:$0xff]
        %v340 = vld [vmem:[%s331 + $0x38] sm:$0xff]
        %v341 = vld [vmem:[%s331 + $0x40] sm:$0xff]
        %v342 = vld [vmem:[%s331 + $0x48] sm:$0xff]
        %v343 = vld [vmem:[%s331 + $0x50] sm:$0xff]
        %v344 = vld [vmem:[%s331 + $0x58] sm:$0xff]
        %v345 = vld [vmem:[%s331 + $0x60] sm:$0xff]
        %v346 = vld [vmem:[%s331 + $0x68] sm:$0xff]
        %v347 = vld [vmem:[%s331 + $0x70] sm:$0xff]
        %v348 = vld [vmem:[%s331 + $0x78] sm:$0xff]
        %v349 = vld [vmem:[%s1] sm:$0xff]
        %v350 = vld [vmem:[%s1 + $0x8] sm:$0xff]
        %v351 = vld [vmem:[%s1 + $0x10] sm:$0xff]
        %v352 = vld [vmem:[%s1 + $0x18] sm:$0xff]
        %v353 = vld [vmem:[%s1 + $0x20] sm:$0xff]
        %v354 = vld [vmem:[%s1 + $0x28] sm:$0xff]
        %v355 = vld [vmem:[%s1 + $0x30] sm:$0xff]
        %v356 = vld [vmem:[%s1 + $0x38] sm:$0xff]
        %v357 = vld [vmem:[%s2] sm:$0xff]
        %v358 = vld [vmem:[%s2 + $0x8] sm:$0xff]
        %v359 = vld [vmem:[%s2 + $0x10] sm:$0xff]
        %v360 = vld [vmem:[%s2 + $0x18] sm:$0xff]
        %v361 = vld [vmem:[%s2 + $0x20] sm:$0xff]
        %v362 = vld [vmem:[%s2 + $0x28] sm:$0xff]
        %v363 = vld [vmem:[%s2 + $0x30] sm:$0xff]
        %v364 = vld [vmem:[%s2 + $0x38] sm:$0xff]
        %366 = vset.pattern.permute.xlu0 0
        %367 = vperm.xlu0 %366, %v357
        %v368 = vpop.permute.xlu0 %367
        %371 = vset.pattern.permute.xlu0 0
        %372 = vperm.xlu0 %371, %v358
        %v373 = vpop.permute.xlu0 %372
        %376 = vset.pattern.permute.xlu0 0
        %377 = vperm.xlu0 %376, %v359
        %v378 = vpop.permute.xlu0 %377
        %381 = vset.pattern.permute.xlu0 0
        %382 = vperm.xlu0 %381, %v360
        %v383 = vpop.permute.xlu0 %382
        %386 = vset.pattern.permute.xlu0 0
        %387 = vperm.xlu0 %386, %v361
        %v388 = vpop.permute.xlu0 %387
        %391 = vset.pattern.permute.xlu0 0
        %392 = vperm.xlu0 %391, %v362
        %v393 = vpop.permute.xlu0 %392
        %396 = vset.pattern.permute.xlu0 0
        %397 = vperm.xlu0 %396, %v363
        %v398 = vpop.permute.xlu0 %397
        %401 = vset.pattern.permute.xlu0 0
        %402 = vperm.xlu0 %401, %v364
        %v403 = vpop.permute.xlu0 %402
        %vm405 = vcmask 261120
        %v407 = vsel %vm405, %v349, 0
        %v410 = vsel %vm405, %v350, 0
        %v413 = vsel %vm405, %v351, 0
        %v416 = vsel %vm405, %v352, 0
        %v419 = vsel %vm405, %v353, 0
        %v422 = vsel %vm405, %v354, 0
        %v425 = vsel %vm405, %v355, 0
        %v428 = vsel %vm405, %v356, 0
        %v431 = vsel %vm405, %v333, 0
        %v434 = vsel %vm405, %v334, 0
        %v437 = vsel %vm405, %v335, 0
        %v440 = vsel %vm405, %v336, 0
        %v443 = vsel %vm405, %v337, 0
        %v446 = vsel %vm405, %v338, 0
        %v449 = vsel %vm405, %v339, 0
        %v452 = vsel %vm405, %v340, 0
        %v455 = vsel %vm405, %v341, 0
        %v458 = vsel %vm405, %v342, 0
        %v461 = vsel %vm405, %v343, 0
        %v464 = vsel %vm405, %v344, 0
        %v467 = vsel %vm405, %v345, 0
        %v470 = vsel %vm405, %v346, 0
        %v473 = vsel %vm405, %v347, 0
        %v476 = vsel %vm405, %v348, 0
        %478 = vmatprep.subr.mxu0 0.0
        %479 = vmatpush1.xpose.msra.mxu0 %v476
        %480 = vmatprep.subr.mxu0 0.0
        %481 = vmatpush1.xpose.msra.mxu0 %v473
        %482 = vmatprep.subr.mxu0 0.0
        %483 = vmatpush1.xpose.msra.mxu0 %v470
        %484 = vmatprep.subr.mxu0 0.0
        %485 = vmatpush1.xpose.msra.mxu0 %v467
        %486 = vmatprep.subr.mxu0 0.0
        %487 = vmatpush1.xpose.msra.mxu0 %v464
        %488 = vmatprep.subr.mxu0 0.0
        %489 = vmatpush1.xpose.msra.mxu0 %v461
        %490 = vmatprep.subr.mxu0 0.0
        %491 = vmatpush1.xpose.msra.mxu0 %v458
        %492 = vmatprep.subr.mxu0 0.0
        %493 = vmatpush1.xpose.msra.mxu0 %v455
        %494 = vmatprep.subr.mxu0 0.0
        %495 = vmatpush1.xpose.msra.mxu0 %v452
        %496 = vmatprep.subr.mxu0 0.0
        %497 = vmatpush1.xpose.msra.mxu0 %v449
        %498 = vmatprep.subr.mxu0 0.0
        %499 = vmatpush1.xpose.msra.mxu0 %v446
        %500 = vmatprep.subr.mxu0 0.0
        %501 = vmatpush1.xpose.msra.mxu0 %v443
        %502 = vmatprep.subr.mxu0 0.0
        %503 = vmatpush1.xpose.msra.mxu0 %v440
        %504 = vmatprep.subr.mxu0 0.0
        %505 = vmatpush1.xpose.msra.mxu0 %v437
        %506 = vmatprep.subr.mxu0 0.0
        %507 = vmatpush1.xpose.msra.mxu0 %v434
        %508 = vmatprep.subr.mxu0 0.0
        %509 = vmatpush1.xpose.msra.mxu0 %v431
        %510 = vmatprep.subr.mxu0 0.0
        %511 = vmatpush2.xpose.msra.mxu0 0.0
        %512 = vmatprep.subr.mxu0 0.0
        %513 = vmatpush2.xpose.msra.mxu0 0.0
        %514 = vmatprep.subr.mxu0 0.0
        %515 = vmatpush2.xpose.msra.mxu0 0.0
        %516 = vmatprep.subr.mxu0 0.0
        %517 = vmatpush2.xpose.msra.mxu0 0.0
        %518 = vmatprep.subr.mxu0 0.0
        %519 = vmatpush2.xpose.msra.mxu0 0.0
        %520 = vmatprep.subr.mxu0 0.0
        %521 = vmatpush2.xpose.msra.mxu0 0.0
        %522 = vmatprep.subr.mxu0 0.0
        %523 = vmatpush2.xpose.msra.mxu0 0.0
        %524 = vmatprep.subr.mxu0 0.0
        %525 = vmatpush2.xpose.msra.mxu0 0.0
        %526 = vmatprep.subr.mxu0 0.0
        %527 = vmatpush2.xpose.msra.mxu0 0.0
        %528 = vmatprep.subr.mxu0 0.0
        %529 = vmatpush2.xpose.msra.mxu0 0.0
        %530 = vmatprep.subr.mxu0 0.0
        %531 = vmatpush2.xpose.msra.mxu0 0.0
        %532 = vmatprep.subr.mxu0 0.0
        %533 = vmatpush2.xpose.msra.mxu0 0.0
        %534 = vmatprep.subr.mxu0 0.0
        %535 = vmatpush2.xpose.msra.mxu0 0.0
        %536 = vmatprep.subr.mxu0 0.0
        %537 = vmatpush2.xpose.msra.mxu0 0.0
        %538 = vmatprep.subr.mxu0 0.0
        %539 = vmatpush2.xpose.msra.mxu0 0.0
        %540 = vmatprep.subr.mxu0 0.0
        %541 = vmatpush2.xpose.msra.mxu0 0.0
        %542 = vmatprep.mubr.f32.mxu0 0.0
        %543 = vmatmul.mubr.f32.gmra.mxu0 %v407
        %v544 = vpop.f32.mrf.mxu0
        %v545 = vadd.f32 %v368, %v544
        %v546 = vpop.f32.mrf.mxu0
        %547 = vmatprep.mubr.f32.mxu0 0.0
        %548 = vmatmul.mubr.f32.gmra.mxu0 %v410
        %v549 = vpop.f32.mrf.mxu0
        %v550 = vadd.f32 %v373, %v549
        %v551 = vpop.f32.mrf.mxu0
        %552 = vmatprep.mubr.f32.mxu0 0.0
        %553 = vmatmul.mubr.f32.gmra.mxu0 %v413
        %v554 = vpop.f32.mrf.mxu0
        %v555 = vadd.f32 %v378, %v554
        %v556 = vpop.f32.mrf.mxu0
        %557 = vmatprep.mubr.f32.mxu0 0.0
        %558 = vmatmul.mubr.f32.gmra.mxu0 %v416
        %v559 = vpop.f32.mrf.mxu0
        %v560 = vadd.f32 %v383, %v559
        %v561 = vpop.f32.mrf.mxu0
        %562 = vmatprep.mubr.f32.mxu0 0.0
        %563 = vmatmul.mubr.f32.gmra.mxu0 %v419
        %v564 = vpop.f32.mrf.mxu0
        %v565 = vadd.f32 %v388, %v564
        %v566 = vpop.f32.mrf.mxu0
        %567 = vmatprep.mubr.f32.mxu0 0.0
        %568 = vmatmul.mubr.f32.gmra.mxu0 %v422
        %v569 = vpop.f32.mrf.mxu0
        %v570 = vadd.f32 %v393, %v569
        %v571 = vpop.f32.mrf.mxu0
        %572 = vmatprep.mubr.f32.mxu0 0.0
        %573 = vmatmul.mubr.f32.gmra.mxu0 %v425
        %v574 = vpop.f32.mrf.mxu0
        %v575 = vadd.f32 %v398, %v574
        %v576 = vpop.f32.mrf.mxu0
        %577 = vmatprep.mubr.f32.mxu0 0.0
        %578 = vmatmul.mubr.f32.gmra.mxu0 %v428
        %v579 = vpop.f32.mrf.mxu0
        %v580 = vadd.f32 %v403, %v579
        %v581 = vpop.f32.mrf.mxu0
        %582 = vdwg.mxu0
        %v583 = vmax.f32 %v545, 0.0
        %v584 = vmax.f32 %v550, 0.0
        %v585 = vmax.f32 %v555, 0.0
        %v586 = vmax.f32 %v560, 0.0
        %v587 = vmax.f32 %v565, 0.0
        %v588 = vmax.f32 %v570, 0.0
        %v589 = vmax.f32 %v575, 0.0
        %v590 = vmax.f32 %v580, 0.0
        %v591 = vld [vmem:[%s3] sm:$0xff]
        %v592 = vld [vmem:[%s3 + $0x8] sm:$0xff]
        %v593 = vld [vmem:[%s3 + $0x10] sm:$0xff]
        %v594 = vld [vmem:[%s3 + $0x18] sm:$0xff]
        %v595 = vld [vmem:[%s4] sm:$0xff]
        %v596 = vld [vmem:[%s4 + $0x8] sm:$0xff]
        %v597 = vld [vmem:[%s4 + $0x10] sm:$0xff]
        %v598 = vld [vmem:[%s4 + $0x18] sm:$0xff]
        %600 = vset.pattern.permute.xlu0 0
        %601 = vperm.xlu0 %600, %v595
        %v602 = vpop.permute.xlu0 %601
        %605 = vset.pattern.permute.xlu0 0
        %606 = vperm.xlu0 %605, %v596
        %v607 = vpop.permute.xlu0 %606
        %610 = vset.pattern.permute.xlu0 0
        %611 = vperm.xlu0 %610, %v597
        %v612 = vpop.permute.xlu0 %611
        %615 = vset.pattern.permute.xlu0 0
        %616 = vperm.xlu0 %615, %v598
        %v617 = vpop.permute.xlu0 %616
        %vm619 = vcmask 523264
        %v621 = vsel %vm619, %v591, 0
        %v624 = vsel %vm619, %v592, 0
        %v627 = vsel %vm619, %v593, 0
        %v630 = vsel %vm619, %v594, 0
        %632 = vmatprep.subr.mxu0 0.0
        %633 = vmatpush1.msra.mxu0 0.0
        %634 = vmatprep.subr.mxu0 0.0
        %635 = vmatpush1.msra.mxu0 0.0
        %636 = vmatprep.subr.mxu0 0.0
        %637 = vmatpush1.msra.mxu0 0.0
        %638 = vmatprep.subr.mxu0 0.0
        %639 = vmatpush1.msra.mxu0 0.0
        %640 = vmatprep.subr.mxu0 0.0
        %641 = vmatpush1.msra.mxu0 0.0
        %642 = vmatprep.subr.mxu0 0.0
        %643 = vmatpush1.msra.mxu0 0.0
        %644 = vmatprep.subr.mxu0 0.0
        %645 = vmatpush1.msra.mxu0 0.0
        %646 = vmatprep.subr.mxu0 0.0
        %647 = vmatpush1.msra.mxu0 0.0
        %648 = vmatprep.subr.mxu0 0.0
        %649 = vmatpush1.msra.mxu0 %v590
        %650 = vmatprep.subr.mxu0 0.0
        %651 = vmatpush1.msra.mxu0 %v589
        %652 = vmatprep.subr.mxu0 0.0
        %653 = vmatpush1.msra.mxu0 %v588
        %654 = vmatprep.subr.mxu0 0.0
        %655 = vmatpush1.msra.mxu0 %v587
        %656 = vmatprep.subr.mxu0 0.0
        %657 = vmatpush1.msra.mxu0 %v586
        %658 = vmatprep.subr.mxu0 0.0
        %659 = vmatpush1.msra.mxu0 %v585
        %660 = vmatprep.subr.mxu0 0.0
        %661 = vmatpush1.msra.mxu0 %v584
        %662 = vmatprep.subr.mxu0 0.0
        %663 = vmatpush1.msra.mxu0 %v583
        %664 = vmatprep.subr.mxu0 0.0
        %665 = vmatpush2.msra.mxu0 0.0
        %666 = vmatprep.subr.mxu0 0.0
        %667 = vmatpush2.msra.mxu0 0.0
        %668 = vmatprep.subr.mxu0 0.0
        %669 = vmatpush2.msra.mxu0 0.0
        %670 = vmatprep.subr.mxu0 0.0
        %671 = vmatpush2.msra.mxu0 0.0
        %672 = vmatprep.subr.mxu0 0.0
        %673 = vmatpush2.msra.mxu0 0.0
        %674 = vmatprep.subr.mxu0 0.0
        %675 = vmatpush2.msra.mxu0 0.0
        %676 = vmatprep.subr.mxu0 0.0
        %677 = vmatpush2.msra.mxu0 0.0
        %678 = vmatprep.subr.mxu0 0.0
        %679 = vmatpush2.msra.mxu0 0.0
        %680 = vmatprep.subr.mxu0 0.0
        %681 = vmatpush2.msra.mxu0 0.0
        %682 = vmatprep.subr.mxu0 0.0
        %683 = vmatpush2.msra.mxu0 0.0
        %684 = vmatprep.subr.mxu0 0.0
        %685 = vmatpush2.msra.mxu0 0.0
        %686 = vmatprep.subr.mxu0 0.0
        %687 = vmatpush2.msra.mxu0 0.0
        %688 = vmatprep.subr.mxu0 0.0
        %689 = vmatpush2.msra.mxu0 0.0
        %690 = vmatprep.subr.mxu0 0.0
        %691 = vmatpush2.msra.mxu0 0.0
        %692 = vmatprep.subr.mxu0 0.0
        %693 = vmatpush2.msra.mxu0 0.0
        %694 = vmatprep.subr.mxu0 0.0
        %695 = vmatpush2.msra.mxu0 0.0
        %696 = vmatprep.mubr.f32.mxu0 0.0
        %697 = vmatmul.mubr.f32.gmra.mxu0 %v621
        %v698 = vpop.f32.mrf.mxu0
        %v699 = vadd.f32 %v602, %v698
        %v700 = vpop.f32.mrf.mxu0
        %701 = vmatprep.mubr.f32.mxu0 0.0
        %702 = vmatmul.mubr.f32.gmra.mxu0 %v624
        %v703 = vpop.f32.mrf.mxu0
        %v704 = vadd.f32 %v607, %v703
        %v705 = vpop.f32.mrf.mxu0
        %706 = vmatprep.mubr.f32.mxu0 0.0
        %707 = vmatmul.mubr.f32.gmra.mxu0 %v627
        %v708 = vpop.f32.mrf.mxu0
        %v709 = vadd.f32 %v612, %v708
        %v710 = vpop.f32.mrf.mxu0
        %711 = vmatprep.mubr.f32.mxu0 0.0
        %712 = vmatmul.mubr.f32.gmra.mxu0 %v630
        %v713 = vpop.f32.mrf.mxu0
        %v714 = vadd.f32 %v617, %v713
        %v715 = vpop.f32.mrf.mxu0
        %716 = vdwg.mxu0
        %v717 = vmax.f32 %v699, 0.0
        %v718 = vmax.f32 %v704, 0.0
        %v719 = vmax.f32 %v709, 0.0
        %v720 = vmax.f32 %v714, 0.0
        %v721 = vld [vmem:[%s5] sm:$0xff]
        %v722 = vld [vmem:[%s5 + $0x8] sm:$0xff]
        %v723 = vld [vmem:[%s6] sm:$0xff]
        %v724 = vld [vmem:[%s6 + $0x8] sm:$0xff]
        %726 = vset.pattern.permute.xlu0 0
        %727 = vperm.xlu0 %726, %v723
        %v728 = vpop.permute.xlu0 %727
        %731 = vset.pattern.permute.xlu0 0
        %732 = vperm.xlu0 %731, %v724
        %v733 = vpop.permute.xlu0 %732
        %v736 = vsel %vm405, %v721, 0
        %v739 = vsel %vm405, %v722, 0
        %741 = vmatprep.subr.mxu0 0.0
        %742 = vmatpush1.msra.mxu0 0.0
        %743 = vmatprep.subr.mxu0 0.0
        %744 = vmatpush1.msra.mxu0 0.0
        %745 = vmatprep.subr.mxu0 0.0
        %746 = vmatpush1.msra.mxu0 0.0
        %747 = vmatprep.subr.mxu0 0.0
        %748 = vmatpush1.msra.mxu0 0.0
        %749 = vmatprep.subr.mxu0 0.0
        %750 = vmatpush1.msra.mxu0 0.0
        %751 = vmatprep.subr.mxu0 0.0
        %752 = vmatpush1.msra.mxu0 0.0
        %753 = vmatprep.subr.mxu0 0.0
        %754 = vmatpush1.msra.mxu0 0.0
        %755 = vmatprep.subr.mxu0 0.0
        %756 = vmatpush1.msra.mxu0 0.0
        %757 = vmatprep.subr.mxu0 0.0
        %758 = vmatpush1.msra.mxu0 0.0
        %759 = vmatprep.subr.mxu0 0.0
        %760 = vmatpush1.msra.mxu0 0.0
        %761 = vmatprep.subr.mxu0 0.0
        %762 = vmatpush1.msra.mxu0 0.0
        %763 = vmatprep.subr.mxu0 0.0
        %764 = vmatpush1.msra.mxu0 0.0
        %765 = vmatprep.subr.mxu0 0.0
        %766 = vmatpush1.msra.mxu0 %v720
        %767 = vmatprep.subr.mxu0 0.0
        %768 = vmatpush1.msra.mxu0 %v719
        %769 = vmatprep.subr.mxu0 0.0
        %770 = vmatpush1.msra.mxu0 %v718
        %771 = vmatprep.subr.mxu0 0.0
        %772 = vmatpush1.msra.mxu0 %v717
        %773 = vmatprep.subr.mxu0 0.0
        %774 = vmatpush2.msra.mxu0 0.0
        %775 = vmatprep.subr.mxu0 0.0
        %776 = vmatpush2.msra.mxu0 0.0
        %777 = vmatprep.subr.mxu0 0.0
        %778 = vmatpush2.msra.mxu0 0.0
        %779 = vmatprep.subr.mxu0 0.0
        %780 = vmatpush2.msra.mxu0 0.0
        %781 = vmatprep.subr.mxu0 0.0
        %782 = vmatpush2.msra.mxu0 0.0
        %783 = vmatprep.subr.mxu0 0.0
        %784 = vmatpush2.msra.mxu0 0.0
        %785 = vmatprep.subr.mxu0 0.0
        %786 = vmatpush2.msra.mxu0 0.0
        %787 = vmatprep.subr.mxu0 0.0
        %788 = vmatpush2.msra.mxu0 0.0
        %789 = vmatprep.subr.mxu0 0.0
        %790 = vmatpush2.msra.mxu0 0.0
        %791 = vmatprep.subr.mxu0 0.0
        %792 = vmatpush2.msra.mxu0 0.0
        %793 = vmatprep.subr.mxu0 0.0
        %794 = vmatpush2.msra.mxu0 0.0
        %795 = vmatprep.subr.mxu0 0.0
        %796 = vmatpush2.msra.mxu0 0.0
        %797 = vmatprep.subr.mxu0 0.0
        %798 = vmatpush2.msra.mxu0 0.0
        %799 = vmatprep.subr.mxu0 0.0
        %800 = vmatpush2.msra.mxu0 0.0
        %801 = vmatprep.subr.mxu0 0.0
        %802 = vmatpush2.msra.mxu0 0.0
        %803 = vmatprep.subr.mxu0 0.0
        %804 = vmatpush2.msra.mxu0 0.0
        %805 = vmatprep.mubr.f32.mxu0 0.0
        %806 = vmatmul.mubr.f32.gmra.mxu0 %v736
        %v807 = vpop.f32.mrf.mxu0
        %v808 = vadd.f32 %v728, %v807
        %v809 = vpop.f32.mrf.mxu0
        %810 = vmatprep.mubr.f32.mxu0 0.0
        %811 = vmatmul.mubr.f32.gmra.mxu0 %v739
        %v812 = vpop.f32.mrf.mxu0
        %v813 = vadd.f32 %v733, %v812
        %v814 = vpop.f32.mrf.mxu0
        %815 = vdwg.mxu0
        %v816 = vmax.f32 %v808, 0.0
        %v817 = vmax.f32 %v813, 0.0
        %v818 = vld [vmem:[%s7] sm:$0x1]
        %s819 = sld [smem:[#allocation2]]
        %v820 = vstv %s819
        %vm821 = vcmask 130048
        %v823 = vsel %vm821, %v818, 0
        %825 = vmatprep.subr.mxu0 0.0
        %826 = vmatpush1.msra.mxu0 0.0
        %827 = vmatprep.subr.mxu0 0.0
        %828 = vmatpush1.msra.mxu0 0.0
        %829 = vmatprep.subr.mxu0 0.0
        %830 = vmatpush1.msra.mxu0 0.0
        %831 = vmatprep.subr.mxu0 0.0
        %832 = vmatpush1.msra.mxu0 0.0
        %833 = vmatprep.subr.mxu0 0.0
        %834 = vmatpush1.msra.mxu0 0.0
        %835 = vmatprep.subr.mxu0 0.0
        %836 = vmatpush1.msra.mxu0 0.0
        %837 = vmatprep.subr.mxu0 0.0
        %838 = vmatpush1.msra.mxu0 0.0
        %839 = vmatprep.subr.mxu0 0.0
        %840 = vmatpush1.msra.mxu0 0.0
        %841 = vmatprep.subr.mxu0 0.0
        %842 = vmatpush1.msra.mxu0 0.0
        %843 = vmatprep.subr.mxu0 0.0
        %844 = vmatpush1.msra.mxu0 0.0
        %845 = vmatprep.subr.mxu0 0.0
        %846 = vmatpush1.msra.mxu0 0.0
        %847 = vmatprep.subr.mxu0 0.0
        %848 = vmatpush1.msra.mxu0 0.0
        %849 = vmatprep.subr.mxu0 0.0
        %850 = vmatpush1.msra.mxu0 0.0
        %851 = vmatprep.subr.mxu0 0.0
        %852 = vmatpush1.msra.mxu0 0.0
        %853 = vmatprep.subr.mxu0 0.0
        %854 = vmatpush1.msra.mxu0 %v817
        %855 = vmatprep.subr.mxu0 0.0
        %856 = vmatpush1.msra.mxu0 %v816
        %857 = vmatprep.subr.mxu0 0.0
        %858 = vmatpush2.msra.mxu0 0.0
        %859 = vmatprep.subr.mxu0 0.0
        %860 = vmatpush2.msra.mxu0 0.0
        %861 = vmatprep.subr.mxu0 0.0
        %862 = vmatpush2.msra.mxu0 0.0
        %863 = vmatprep.subr.mxu0 0.0
        %864 = vmatpush2.msra.mxu0 0.0
        %865 = vmatprep.subr.mxu0 0.0
        %866 = vmatpush2.msra.mxu0 0.0
        %867 = vmatprep.subr.mxu0 0.0
        %868 = vmatpush2.msra.mxu0 0.0
        %869 = vmatprep.subr.mxu0 0.0
        %870 = vmatpush2.msra.mxu0 0.0
        %871 = vmatprep.subr.mxu0 0.0
        %872 = vmatpush2.msra.mxu0 0.0
        %873 = vmatprep.subr.mxu0 0.0
        %874 = vmatpush2.msra.mxu0 0.0
        %875 = vmatprep.subr.mxu0 0.0
        %876 = vmatpush2.msra.mxu0 0.0
        %877 = vmatprep.subr.mxu0 0.0
        %878 = vmatpush2.msra.mxu0 0.0
        %879 = vmatprep.subr.mxu0 0.0
        %880 = vmatpush2.msra.mxu0 0.0
        %881 = vmatprep.subr.mxu0 0.0
        %882 = vmatpush2.msra.mxu0 0.0
        %883 = vmatprep.subr.mxu0 0.0
        %884 = vmatpush2.msra.mxu0 0.0
        %885 = vmatprep.subr.mxu0 0.0
        %886 = vmatpush2.msra.mxu0 0.0
        %887 = vmatprep.subr.mxu0 0.0
        %888 = vmatpush2.msra.mxu0 0.0
        %889 = vmatprep.mubr.f32.mxu0 0.0
        %890 = vmatmul.mubr.f32.gmra.mxu0 %v823
        %v891 = vpop.f32.mrf.mxu0
        %v892 = vadd.f32 %v820, %v891
        %v893 = vpop.f32.mrf.mxu0
        %894 = vdwg.mxu0
        %895 = vst [vmem:[%s326] sm:$0x1] %v892
        %s896 = sand.u32 %s226, 1
        %s897 = scalar_lea.sflag [#allocation4], %s896
        %s898 = sand.u32 %s226, 1
        %s899 = scalar_lea.vmem [#allocation3], %s898
        // Predicated region
        $region57: #{tpu_custom_call.1} parent=55 // pred_check
          %p900 = pneg %p236
        $region58: #{tpu_custom_call.1} parent=55 // pred_check_branch
          %902 = sbr.rel (%p900) target = $region60
        $region59: #{tpu_custom_call.1} parent=55 // pred_region
          %s904 = ssub.s32 16, 16
          %905 = vsyncadd %s897, %s904
          %s906 = smul.addr %s24, 16
          %s907 = scalar_lea.hbm %s9, %s906
          %s909 = sshll.u32 %s899, 4
          %s910 = int_to_ptr.vmem [resolvable:$true] %s909
          %912 = dma.vmem_to_hbm [thread:$0]  %s910, 16, %s907, %s897
        $region60: #{tpu_custom_call.1} parent=55 // pred_fallthru
          _
      $region56: #{tpu_custom_call.1} parent=5 // pred_fallthru
        _
      %p913 = scmp.le.s32.totalorder 2, %s19
      // Predicated region
      $region61: #{tpu_custom_call.1} parent=5 // pred_check
        %p914 = pneg %p913
      $region62: #{tpu_custom_call.1} parent=5 // pred_check_branch
        %916 = sbr.rel (%p914) target = $region64
      $region63: #{tpu_custom_call.1} parent=5 // pred_region
        %s917 = ssub.s32 %s19, 2
        // Predicated region
        $region65: #{tpu_custom_call.1} parent=63 // pred_check
          %p918 = pneg %p242
        $region66: #{tpu_custom_call.1} parent=63 // pred_check_branch
          %920 = sbr.rel (%p918) target = $region68
        $region67: #{tpu_custom_call.1} parent=63 // pred_region
          %s921 = sand.u32 %s227, 1
          %s922 = scalar_lea.sflag [#allocation4], %s921
          %s923 = sand.u32 %s227, 1
          %s924 = scalar_lea.vmem [#allocation3], %s923
          %925 = dma.done %s922, 16
        $region68: #{tpu_custom_call.1} parent=63 // pred_fallthru
          _
      $region64: #{tpu_custom_call.1} parent=5 // pred_fallthru
        _
    $region6: #{tpu_custom_call.1} parent=1 // loop_footer
      %s23 = sadd.s32 1, %s19
    $region7: #{tpu_custom_call.1} parent=1 // loop_footer_branch
      %18 = sbr.rel target = $region3
    $region8: #{tpu_custom_call.1} parent=1 // loop_exit
      _
    %926 = vsyncpa [#allocation4], 1
    %s927 = scalar_lea.sflag [#allocation4], 1
    %928 = vsyncpa %s927, 1

</llo_original>
